<compile_context>
chip_gen: v5e
topology: v5e:2x2
jax: 0.10.0
libtpu: 0.0.40
codegen_flags: <defaults>
</compile_context>

<pallas_src>
import math
import functools

import jax
import jax.numpy as jnp
from jax import lax
from jax.experimental import pallas as pl
from jax.experimental.pallas import tpu as pltpu


def _round_up(v, m):
    return (v + m - 1) // m * m


def _pick_divisor(total, candidates):
    for c in candidates:
        if c <= total and total % c == 0:
            return c
    return total


def _vmem_limit_bytes():
    # ~80% of physical VMEM: ~102 MiB on v5e/v6e (128 MiB), ~51 MiB on v7x (64 MiB).
    try:
        cap = int(pltpu.get_tpu_info().vmem_capacity_bytes)
    except Exception:
        cap = 128 * 1024 * 1024
    return min(int(cap * 0.8), 112 * 1024 * 1024)


def _erf(x):
    # Abramowitz & Stegun 7.1.26 (|err| < 1.5e-7): matches torch's erf-GELU.
    a1, a2, a3, a4, a5 = (0.254829592, -0.284496736, 1.421413741,
                          -1.453152027, 1.061405429)
    p = 0.3275911
    s = jnp.where(x >= 0.0, 1.0, -1.0)
    ax = jnp.abs(x)
    t = 1.0 / (1.0 + p * ax)
    poly = ((((a5 * t + a4) * t + a3) * t + a2) * t + a1) * t
    return s * (1.0 - poly * jnp.exp(-ax * ax))


def _gelu_exact(x):
    # Matches torch.nn.functional.gelu (default, erf-based).
    return 0.5 * x * (1.0 + _erf(x * (1.0 / math.sqrt(2.0))))


# ---------------------------------------------------------------------------
# Kernel 1: fused QKV projection on the flattened (B*S_pad, E_pad) matrix.
# Grid: (row tiles, projection in {q,k,v}, output-column tiles).
# ---------------------------------------------------------------------------
def qkv_proj_kernel(x_ref, w_ref, b_ref, qkv_ref):
    x = x_ref[...].astype(jnp.bfloat16)                  # (tm, E_pad) bf16 operand
    w = w_ref[0]                                         # (E_pad, tn)  bf16 weight
    y = jnp.dot(x, w, preferred_element_type=jnp.float32) + b_ref[0]
    qkv_ref[0] = y.astype(qkv_ref.dtype)


# ---------------------------------------------------------------------------
# Kernel 2: attention (full K/V, one q-tile per step) + LayerNorm + GELU + res.
# ---------------------------------------------------------------------------
def attn_block_kernel(q_ref, k_ref, v_ref, x_ref, gamma_ref, beta_ref,
                      out_ref, scores_ref, *, use_mask, s_real, e_real, eps):
    q = q_ref[0, 0]                      # (TQ, E_pad) bf16, 1/sqrt(E) pre-folded
    k = k_ref[0, 0]                      # (S_pad, E_pad) bf16
    v = v_ref[0, 0]                      # (S_pad, E_pad) bf16
    tq, e_pad = q.shape
    s_pad = k.shape[0]

    # scores = q @ k^T as a contraction on E: bf16 MXU operands, f32 acc, no
    # XLU transpose of k.
    scores = lax.dot_general(q, k, dimension_numbers=(((1,), (1,)), ((), ())),
                             preferred_element_type=jnp.float32)  # (TQ, S_pad)

    if use_mask:
        # Causal tril mask (also hides zero-padded key rows for valid queries).
        q0 = pl.program_id(1) * tq
        row = lax.broadcasted_iota(jnp.int32, (tq, s_pad), 0) + q0
        col = lax.broadcasted_iota(jnp.int32, (tq, s_pad), 1)
        scores = jnp.where(col <= row, scores, jnp.float32(-1e9))
    elif s_pad != s_real:
        # No causal mask, but padded key rows must not attend.
        col = lax.broadcasted_iota(jnp.int32, (tq, s_pad), 1)
        scores = jnp.where(col < s_real, scores, jnp.float32(-1e9))

    # Softmax; the divide goes to the EUP via approx reciprocal.
    m = jnp.max(scores, axis=-1, keepdims=True)
    e = jnp.exp(scores - m)
    attn_w = e * pl.reciprocal(jnp.sum(e, axis=-1, keepdims=True), approx=True)

    # PV matmul on bf16 operands, f32 accumulation.
    attn = jnp.dot(attn_w.astype(jnp.bfloat16), v,
                   preferred_element_type=jnp.float32)            # (TQ, E_pad)

    # LayerNorm over the *real* embed width (padded attn columns are exactly 0
    # because the padded columns of W_qkv/b_qkv are exactly 0, also in bf16).
    inv_e = 1.0 / e_real
    mu = jnp.sum(attn, axis=-1, keepdims=True) * inv_e
    diff = attn - mu
    if e_pad != e_real:
        ecol = lax.broadcasted_iota(jnp.int32, (tq, e_pad), 1)
        diff = jnp.where(ecol < e_real, diff, 0.0)
    var = jnp.sum(diff * diff, axis=-1, keepdims=True) * inv_e
    normed = diff * lax.rsqrt(var + eps)                 # EUP rsqrt, no divide
    ctx = normed * gamma_ref[...] + beta_ref[...]

    out_ref[0] = (_gelu_exact(ctx) + x_ref[0]).astype(out_ref.dtype)
    # TODO(synk): emit scores in bf16 behind a flag if the consumer tolerates
    # it — for large S this writeback, not the matmuls, is the HBM roofline.
    scores_ref[0] = attn_w.astype(scores_ref.dtype)


# ---------------------------------------------------------------------------
# Wrapper
# ---------------------------------------------------------------------------
def transformer_block(x, params, mask, *, eps=1e-5):
    B, S, E = x.shape
    dtype = x.dtype
    use_mask = bool(mask)

    # E (lanes of x/q/k/v/out) pads to x128. S (q rows = sublanes) pads only to
    # x8 for small sequences; for S > 256 it pads to x256 so the scores' key
    # axis is lane-dense and tq=256 tiles evenly.
    e_pad = _round_up(E, 128)
    if S <= 256:
        s_pad = _round_up(S, 8)
        tq = s_pad
    else:
        s_pad = _round_up(S, 256)
        tq = 256
    m_rows = B * s_pad
    tm = _pick_divisor(m_rows, (1024, 512, 256, 128, 64, 32, 16, 8))
    tn = _pick_divisor(e_pad, (512, 256, 128))
    vmem_limit = _vmem_limit_bytes()

    x_pad = jnp.zeros((B, s_pad, e_pad), dtype).at[:, :S, :E].set(x)

    # Fused QKV weights, (3, E_pad, E_pad) in bf16; 1/sqrt(E) folded into Wq/bq.
    # Padded regions are exactly zero (bf16(0) == 0), which LayerNorm relies on.
    inv_sqrt_e = 1.0 / math.sqrt(E)
    w_qkv = jnp.zeros((3, e_pad, e_pad), jnp.float32)
    w_qkv = w_qkv.at[0, :E, :E].set(params["wq"] * inv_sqrt_e)
    w_qkv = w_qkv.at[1, :E, :E].set(params["wk"])
    w_qkv = w_qkv.at[2, :E, :E].set(params["wv"])
    w_qkv = w_qkv.astype(jnp.bfloat16)
    b_qkv = jnp.zeros((3, 1, e_pad), jnp.float32)
    b_qkv = b_qkv.at[0, :, :E].set(params["bq"] * inv_sqrt_e)
    b_qkv = b_qkv.at[1, :, :E].set(params["bk"])
    b_qkv = b_qkv.at[2, :, :E].set(params["bv"])
    gamma = jnp.zeros((1, e_pad), jnp.float32).at[:, :E].set(params["gamma"])
    beta = jnp.zeros((1, e_pad), jnp.float32).at[:, :E].set(params["beta"])

    # ---- Kernel 1: QKV projection, weight tiled over (proj, out-cols) -------
    x2d = x_pad.reshape(m_rows, e_pad)
    qkv = pl.pallas_call(
        qkv_proj_kernel,
        out_shape=jax.ShapeDtypeStruct((3, m_rows, e_pad), jnp.bfloat16),
        grid_spec=pltpu.PrefetchScalarGridSpec(
            num_scalar_prefetch=0,
            grid=(m_rows // tm, 3, e_pad // tn),
            in_specs=[
                # x rows: constant across the inner (proj, col) steps -> no re-DMA
                pl.BlockSpec((tm, e_pad), lambda m, p, c: (m, 0)),
                pl.BlockSpec((1, e_pad, tn), lambda m, p, c: (p, 0, c)),   # W tile
                pl.BlockSpec((1, 1, tn), lambda m, p, c: (p, 0, c)),       # bias tile
            ],
            out_specs=pl.BlockSpec((1, tm, tn), lambda m, p, c: (p, m, c)),
        ),
        compiler_params=pltpu.CompilerParams(
            dimension_semantics=("parallel", "parallel", "parallel"),
            vmem_limit_bytes=vmem_limit),
    )(x2d, w_qkv, b_qkv)

    qkv = qkv.reshape(3, B, s_pad, e_pad)   # contiguous; free reshape

    # ---- Kernel 2: attention + LayerNorm + GELU + residual ------------------
    kernel = functools.partial(attn_block_kernel, use_mask=use_mask,
                               s_real=S, e_real=E, eps=eps)
    out_pad, scores_pad = pl.pallas_call(
        kernel,
        out_shape=(jax.ShapeDtypeStruct((B, s_pad, e_pad), dtype),
                   jax.ShapeDtypeStruct((B, s_pad, s_pad), dtype)),
        grid_spec=pltpu.PrefetchScalarGridSpec(
            num_scalar_prefetch=0,
            grid=(B, s_pad // tq),
            in_specs=[
                # The same qkv array is passed three times with different
                # leading-axis block indices (q=0, k=1, v=2): no wrapper slices.
                pl.BlockSpec((1, 1, tq, e_pad), lambda b, qt: (0, b, qt, 0)),
                pl.BlockSpec((1, 1, s_pad, e_pad), lambda b, qt: (1, b, 0, 0)),
                pl.BlockSpec((1, 1, s_pad, e_pad), lambda b, qt: (2, b, 0, 0)),
                pl.BlockSpec((1, tq, e_pad), lambda b, qt: (b, qt, 0)),      # x
                pl.BlockSpec((1, e_pad), lambda b, qt: (0, 0)),              # gamma
                pl.BlockSpec((1, e_pad), lambda b, qt: (0, 0)),              # beta
            ],
            out_specs=[
                pl.BlockSpec((1, tq, e_pad), lambda b, qt: (b, qt, 0)),
                pl.BlockSpec((1, tq, s_pad), lambda b, qt: (b, qt, 0)),
            ],
        ),
        compiler_params=pltpu.CompilerParams(
            dimension_semantics=("parallel", "parallel"),
            vmem_limit_bytes=vmem_limit),
    )(qkv, qkv, qkv, x_pad, gamma, beta)

    return out_pad[:, :S, :E], scores_pad[:, :S, :S]


def init_params(key, embed_size):
    ks = jax.random.split(key, 6)
    scale = 1.0 / math.sqrt(embed_size)
    u = lambda k, shape: jax.random.uniform(k, shape, jnp.float32, -scale, scale)
    return {
        # Linear weights stored already transposed to (in, out).
        "wq": u(ks[0], (embed_size, embed_size)),
        "bq": u(ks[1], (1, embed_size)),
        "wk": u(ks[2], (embed_size, embed_size)),
        "bk": u(ks[3], (1, embed_size)),
        "wv": u(ks[4], (embed_size, embed_size)),
        "bv": u(ks[5], (1, embed_size)),
        # LayerNorm default init: weight = 1, bias = 0.
        "gamma": jnp.ones((1, embed_size), jnp.float32),
        "beta": jnp.zeros((1, embed_size), jnp.float32),
    }


def _reference(x, params, mask, eps=1e-5):
    # Pure-JAX mirror of the PyTorch forward (sanity check only).
    E = x.shape[-1]
    q = x @ params["wq"] + params["bq"]
    k = x @ params["wk"] + params["bk"]
    v = x @ params["wv"] + params["bv"]
    scores = jnp.einsum("bqe,bke->bqk", q, k) / math.sqrt(E)
    if mask:
        S = x.shape[1]
        tril = jnp.tril(jnp.ones((S, S)))
        scores = jnp.where(tril == 0, -1e9, scores)
    attn_w = jax.nn.softmax(scores, axis=-1)
    attn = jnp.einsum("bqk,bke->bqe", attn_w, v)
    mu = attn.mean(-1, keepdims=True)
    var = ((attn - mu) ** 2).mean(-1, keepdims=True)
    ctx = (attn - mu) / jnp.sqrt(var + eps) * params["gamma"] + params["beta"]
    out = jax.nn.gelu(ctx, approximate=False) + x
    return out, attn_w


if __name__ == "__main__":
    B, S, E = 2, 8, 32
    key = jax.random.PRNGKey(0)
    kx, kp = jax.random.split(key)
    x = jax.random.normal(kx, (B, S, E), jnp.float32)
    params = init_params(kp, E)

    out, attention_scores = transformer_block(x, params, mask=True)
    jax.block_until_ready((out, attention_scores))

    assert out.shape == (B, S, E)
    assert attention_scores.shape == (B, S, S)

    # Loose tolerance: bf16 MXU operands + approx reciprocal (softmax) +
    # polynomial erf; LayerNorm amplifies the bf16 error of the intermediates.
    ref_out, ref_scores = _reference(x, params, True)
    assert jnp.allclose(out, ref_out, atol=2e-2, rtol=2e-2), \
        float(jnp.max(jnp.abs(out - ref_out)))
    assert jnp.allclose(attention_scores, ref_scores, atol=1e-2, rtol=1e-2), \
        float(jnp.max(jnp.abs(attention_scores - ref_scores)))

    print("KERNEL_OK")
</pallas_src>

<mosaic_0001>
module attributes {stable_mosaic.version = 11 : i64} {
  func.func @qkv_proj_kernel(%arg0: i32, %arg1: i32, %arg2: i32, %arg3: memref<16x128xf32, #tpu.memory_space<vmem>>, %arg4: memref<1x128x128xbf16, #tpu.memory_space<vmem>>, %arg5: memref<1x1x128xf32, #tpu.memory_space<vmem>>, %arg6: memref<1x16x128xbf16, #tpu.memory_space<vmem>>) attributes {dimension_semantics = [#tpu.dimension_semantics<parallel>, #tpu.dimension_semantics<parallel>, #tpu.dimension_semantics<parallel>], iteration_bounds = array<i64: 1, 3, 1>, scalar_prefetch = 0 : i64, scratch_operands = 0 : i64, tpu.core_type = #tpu.core_type<tc>, window_params = [{transform_indices = @transform_0, window_bounds = array<i64: 16, 128>}, {transform_indices = @transform_1, window_bounds = array<i64: 1, 128, 128>}, {transform_indices = @transform_2, window_bounds = array<i64: 1, 1, 128>}, {transform_indices = @transform_3, window_bounds = array<i64: 1, 16, 128>}]} {
    %c0 = arith.constant 0 : index
    %c0_0 = arith.constant 0 : index
    %0 = vector.load %arg3[%c0, %c0_0] : memref<16x128xf32, #tpu.memory_space<vmem>>, vector<16x128xf32>
    %1 = arith.truncf %0 : vector<16x128xf32> to vector<16x128xbf16>
    %c0_1 = arith.constant 0 : index
    %c0_2 = arith.constant 0 : index
    %c0_3 = arith.constant 0 : index
    %2 = vector.load %arg4[%c0_1, %c0_2, %c0_3] : memref<1x128x128xbf16, #tpu.memory_space<vmem>>, vector<1x128x128xbf16>
    %3 = vector.shape_cast %2 : vector<1x128x128xbf16> to vector<128x128xbf16>
    %cst = arith.constant dense<0.000000e+00> : vector<16x128xf32>
    %4 = tpu.matmul %1, %3, %cst {dimension_numbers = #tpu.dot_dimension_numbers<[1], [0], [0], [1], [0, 0, 1, 1], [], []>} : vector<16x128xbf16>, vector<128x128xbf16>, vector<16x128xf32> -> vector<16x128xf32>
    %c0_4 = arith.constant 0 : index
    %c0_5 = arith.constant 0 : index
    %c0_6 = arith.constant 0 : index
    %5 = vector.load %arg5[%c0_4, %c0_5, %c0_6] : memref<1x1x128xf32, #tpu.memory_space<vmem>>, vector<1x1x128xf32>
    %6 = vector.shape_cast %5 : vector<1x1x128xf32> to vector<1x128xf32>
    %7 = vector.broadcast %6 : vector<1x128xf32> to vector<16x128xf32>
    %8 = arith.addf %4, %7 : vector<16x128xf32>
    %9 = arith.truncf %8 : vector<16x128xf32> to vector<16x128xbf16>
    %c0_7 = arith.constant 0 : index
    %c0_8 = arith.constant 0 : index
    %c0_9 = arith.constant 0 : index
    %10 = vector.load %arg6[%c0_7, %c0_8, %c0_9] : memref<1x16x128xbf16, #tpu.memory_space<vmem>>, vector<1x16x128xbf16>
    %11 = vector.shape_cast %10 : vector<1x16x128xbf16> to vector<16x128xbf16>
    %12 = vector.shape_cast %9 : vector<16x128xbf16> to vector<1x16x128xbf16>
    tpu.vector_store %arg6[%c0_7, %c0_8, %c0_9], %12 {strides = array<i32>} : memref<1x16x128xbf16, #tpu.memory_space<vmem>>, vector<1x16x128xbf16>,
    return
  }
  func.func @transform_0(%arg0: i32, %arg1: i32, %arg2: i32) -> (i32, i32) {
    %c0_i32 = arith.constant 0 : i32
    %c0_i32_0 = arith.constant 0 : i32
    return %arg0, %c0_i32 : i32, i32
  }
  func.func @transform_1(%arg0: i32, %arg1: i32, %arg2: i32) -> (i32, i32, i32) {
    %c0_i32 = arith.constant 0 : i32
    %c0_i32_0 = arith.constant 0 : i32
    return %arg1, %c0_i32, %arg2 : i32, i32, i32
  }
  func.func @transform_2(%arg0: i32, %arg1: i32, %arg2: i32) -> (i32, i32, i32) {
    %c0_i32 = arith.constant 0 : i32
    %c0_i32_0 = arith.constant 0 : i32
    return %arg1, %c0_i32, %arg2 : i32, i32, i32
  }
  func.func @transform_3(%arg0: i32, %arg1: i32, %arg2: i32) -> (i32, i32, i32) {
    %c0_i32 = arith.constant 0 : i32
    return %arg1, %arg0, %arg2 : i32, i32, i32
  }
}

</mosaic_0001>

<llo_original>
// kernel: tpu_custom_call.1
$region0: #{tpu_custom_call.1}
  #allocation0 [shape = 'u32[]', space=smem, size = 0x4, offset = 0x4, fixed_abs, tag = 'smem constant byte address 0x4 - core index']
  #allocation1 [shape = 'u32[72,128]{1,0:T(1,128)}', space=vmem, size = 0x9000, scoped, tag = 'internal scratch']
  %s0 = inlined_call_operand.hbm [shape: f32[16,128], index: 0, kind: input, shape index: {}]
  %s1 = inlined_call_operand.hbm [shape: bf16[3,128,128], index: 1, kind: input, shape index: {}]
  %s2 = inlined_call_operand.hbm [shape: f32[3,1,128], index: 2, kind: input, shape index: {}]
  %s3 = inlined_call_operand.hbm [shape: bf16[3,16,128], index: 3, kind: output, shape index: {}]
  %s4 = sld [smem:[#allocation0]]
  $region57: #{tpu_custom_call.1} parent=0
    _
  %s6 = ssub.s32 1, %s4
  %s7 = scalar_select 0, %s6, %s4
  $region1: #{tpu_custom_call.1} parent=0
    #allocation2 [shape = 'u8[8192]{0}', space=vmem, size = 0x2000, scoped, tag = 'input window, operand 0, single buffered']
    #allocation3 [shape = 's32[2]{0}', space=sflag, size = 0x8, scoped, tag = 'scoped memory for tpu_custom_call.1']
    #allocation4 [shape = 's32[2]{0}', space=sflag, size = 0x8, scoped, tag = 'scoped memory for tpu_custom_call.1']
    #allocation5 [shape = 'u8[65536]{0}', space=vmem, size = 0x10000, scoped, tag = 'input window, operand 1']
    #allocation6 [shape = 's32[2]{0}', space=sflag, size = 0x8, scoped, tag = 'scoped memory for tpu_custom_call.1']
    #allocation7 [shape = 'u8[1024]{0}', space=vmem, size = 0x400, scoped, tag = 'input window, operand 2']
    #allocation8 [shape = 'u8[8192]{0}', space=vmem, size = 0x2000, scoped, tag = 'output window, operand 0']
    %8 = vsyncpa [#allocation3], 0
    %9 = vsyncpa [#allocation6], 0
    %s10 = scalar_lea.sflag [#allocation6], 1
    %11 = vsyncpa %s10, 0
    %12 = vsyncpa [#allocation4], 0
    %s13 = scalar_lea.sflag [#allocation4], 1
    %14 = vsyncpa %s13, 0
    loop: start=0, step=1, limit=5
    $region2: #{tpu_custom_call.1} parent=1 // loop_pre_header
      _
    $region3: #{tpu_custom_call.1} parent=1 // loop_header
      %s16 = sphi 0, %s20
      %p17 = scmp.ge.s32.totalorder %s16, 5
      %s23 = sphi 0, %s42
      %s24 = sphi 0, %s38
      %s25 = sphi 0, %s34
      %s26 = sphi 0, %s23
      %s27 = sphi 0, %s24
      %s28 = sphi 0, %s25
      %s29 = sphi 0, %s26
      %s30 = sphi 0, %s27
      %s31 = sphi 0, %s28
      %s45 = sphi 0, %s47
      %s48 = sphi 0, %s45
      %s49 = sphi 0, %s48
      %s65 = sphi 0, %s49
      %s73 = sphi 0, %s75
      %s76 = sphi 0, %s73
      %s77 = sphi 0, %s76
      %s93 = sphi 0, %s77
      %s101 = sphi 0, %s103
      %s104 = sphi 0, %s101
      %s105 = sphi 0, %s104
      %s121 = sphi 0, %s105
      %s131 = sphi 0, %s133
      %s134 = sphi 0, %s131
      %s135 = sphi 0, %s134
      %s151 = sphi 0, %s135
    $region4: #{tpu_custom_call.1} parent=1 // loop_header_branch
      %19 = sbr.rel (%p17) target = $region8
    $region5: #{tpu_custom_call.1} parent=1 // loop_body
      %s21 = ssub.s32 %s16, 1
      %s22 = ssub.s32 %s16, 2
      %s32 = sadd.s32 1, %s25
      %p33 = scmp.ge.s32.totalorder %s32, 1
      %s34 = scalar_select %p33, 0, %s32
      %s35 = sadd.s32 1, %s24
      %s36 = scalar_select %p33, %s35, %s24
      %p37 = scmp.ge.s32.totalorder %s36, 3
      %s38 = scalar_select %p37, 0, %s36
      %s39 = sadd.s32 1, %s23
      %s40 = scalar_select %p37, %s39, %s23
      %p41 = scmp.ge.s32.totalorder %s40, 1
      %s42 = scalar_select %p41, 0, %s40
      %s43 = ssub.s32 %s23, %s42
      %p44 = scmp.eq.s32.totalorder %s43, 0
      %s46 = sadd.s32 %s45, 1
      %s47 = scalar_select %p44, %s45, %s46
      %p50 = pneg %p44
      %p51 = scmp.eq.s32.totalorder %s16, 2
      %p52 = por %p50, %p51
      %p53 = scmp.ne.s32.totalorder %s45, %s48
      %p54 = scmp.eq.s32.totalorder %s16, 0
      %p55 = por %p53, %p54
      %p56 = scmp.ne.s32.totalorder %s45, %s48
      %p57 = scmp.eq.s32.totalorder %s21, 2
      %p58 = por %p56, %p57
      %p59 = scmp.ne.s32.totalorder %s48, %s49
      %p60 = scmp.eq.s32.totalorder %s21, 0
      %p61 = por %p59, %p60
      %p62 = scmp.ne.s32.totalorder %s48, %s49
      %p63 = scmp.eq.s32.totalorder %s22, 2
      %p64 = por %p62, %p63
      %p66 = scmp.ne.s32.totalorder %s49, %s65
      %p67 = scmp.eq.s32.totalorder %s22, 0
      %p68 = por %p66, %p67
      %s69 = ssub.s32 %s24, %s38
      %s70 = ssub.s32 %s25, %s34
      %s71 = sor.u32 %s69, %s70
      %p72 = scmp.eq.s32.totalorder %s71, 0
      %s74 = sadd.s32 %s73, 1
      %s75 = scalar_select %p72, %s73, %s74
      %p78 = pneg %p72
      %p79 = scmp.eq.s32.totalorder %s16, 2
      %p80 = por %p78, %p79
      %p81 = scmp.ne.s32.totalorder %s73, %s76
      %p82 = scmp.eq.s32.totalorder %s16, 0
      %p83 = por %p81, %p82
      %p84 = scmp.ne.s32.totalorder %s73, %s76
      %p85 = scmp.eq.s32.totalorder %s21, 2
      %p86 = por %p84, %p85
      %p87 = scmp.ne.s32.totalorder %s76, %s77
      %p88 = scmp.eq.s32.totalorder %s21, 0
      %p89 = por %p87, %p88
      %p90 = scmp.ne.s32.totalorder %s76, %s77
      %p91 = scmp.eq.s32.totalorder %s22, 2
      %p92 = por %p90, %p91
      %p94 = scmp.ne.s32.totalorder %s77, %s93
      %p95 = scmp.eq.s32.totalorder %s22, 0
      %p96 = por %p94, %p95
      %s97 = ssub.s32 %s24, %s38
      %s98 = ssub.s32 %s25, %s34
      %s99 = sor.u32 %s97, %s98
      %p100 = scmp.eq.s32.totalorder %s99, 0
      %s102 = sadd.s32 %s101, 1
      %s103 = scalar_select %p100, %s101, %s102
      %p106 = pneg %p100
      %p107 = scmp.eq.s32.totalorder %s16, 2
      %p108 = por %p106, %p107
      %p109 = scmp.ne.s32.totalorder %s101, %s104
      %p110 = scmp.eq.s32.totalorder %s16, 0
      %p111 = por %p109, %p110
      %p112 = scmp.ne.s32.totalorder %s101, %s104
      %p113 = scmp.eq.s32.totalorder %s21, 2
      %p114 = por %p112, %p113
      %p115 = scmp.ne.s32.totalorder %s104, %s105
      %p116 = scmp.eq.s32.totalorder %s21, 0
      %p117 = por %p115, %p116
      %p118 = scmp.ne.s32.totalorder %s104, %s105
      %p119 = scmp.eq.s32.totalorder %s22, 2
      %p120 = por %p118, %p119
      %p122 = scmp.ne.s32.totalorder %s105, %s121
      %p123 = scmp.eq.s32.totalorder %s22, 0
      %p124 = por %p122, %p123
      %s125 = ssub.s32 %s24, %s38
      %s126 = ssub.s32 %s23, %s42
      %s127 = sor.u32 %s125, %s126
      %s128 = ssub.s32 %s25, %s34
      %s129 = sor.u32 %s127, %s128
      %p130 = scmp.eq.s32.totalorder %s129, 0
      %s132 = sadd.s32 %s131, 1
      %s133 = scalar_select %p130, %s131, %s132
      %p136 = pneg %p130
      %p137 = scmp.eq.s32.totalorder %s16, 2
      %p138 = por %p136, %p137
      %p139 = scmp.ne.s32.totalorder %s131, %s134
      %p140 = scmp.eq.s32.totalorder %s16, 0
      %p141 = por %p139, %p140
      %p142 = scmp.ne.s32.totalorder %s131, %s134
      %p143 = scmp.eq.s32.totalorder %s21, 2
      %p144 = por %p142, %p143
      %p145 = scmp.ne.s32.totalorder %s134, %s135
      %p146 = scmp.eq.s32.totalorder %s21, 0
      %p147 = por %p145, %p146
      %p148 = scmp.ne.s32.totalorder %s134, %s135
      %p149 = scmp.eq.s32.totalorder %s22, 2
      %p150 = por %p148, %p149
      %p152 = scmp.ne.s32.totalorder %s135, %s151
      %p153 = scmp.eq.s32.totalorder %s22, 0
      %p154 = por %p152, %p153
      %p155 = scmp.le.s32.totalorder 1, %s16
      %p156 = scmp.lt.s32.totalorder %s16, 4
      %p157 = pnand %p155, %p156
      %p158 = pneg %p157
      // Predicated region
      $region9: #{tpu_custom_call.1} parent=5 // pred_check
        _
      $region10: #{tpu_custom_call.1} parent=5 // pred_check_branch
        %160 = sbr.rel (%p157) target = $region12
      $region11: #{tpu_custom_call.1} parent=5 // pred_region
        %s161 = ssub.s32 %s16, 1
        // Predicated region
        $region13: #{tpu_custom_call.1} parent=11 // pred_check
          %p162 = pneg %p61
        $region14: #{tpu_custom_call.1} parent=11 // pred_check_branch
          %164 = sbr.rel (%p162) target = $region16
        $region15: #{tpu_custom_call.1} parent=11 // pred_region
          %s165 = smul.u32 2, %s26
          %167 = vsyncadd [#allocation3], 0
          %s168 = smul.addr %s165, 8
          %s169 = scalar_lea.hbm %s0, %s168
          %s170 = sshll.u32 %s169, 4
          %s171 = int_to_ptr.hbm [resolvable:$true] %s170
          %s172 = sshll.u32 [#allocation2], 4
          %s173 = int_to_ptr.vmem [resolvable:$true] %s172
          %178 = dma.hbm_to_vmem [thread:$0]  %s171, 256, %s173, [#allocation3], 128, 128, 8
        $region16: #{tpu_custom_call.1} parent=11 // pred_fallthru
          _
      $region12: #{tpu_custom_call.1} parent=5 // pred_fallthru
        _
      %p179 = scmp.lt.s32.totalorder %s16, 3
      // Predicated region
      $region17: #{tpu_custom_call.1} parent=5 // pred_check
        %p180 = pneg %p179
      $region18: #{tpu_custom_call.1} parent=5 // pred_check_branch
        %182 = sbr.rel (%p180) target = $region20
      $region19: #{tpu_custom_call.1} parent=5 // pred_region
        // Predicated region
        $region21: #{tpu_custom_call.1} parent=19 // pred_check
          %p183 = pneg %p83
        $region22: #{tpu_custom_call.1} parent=19 // pred_check_branch
          %185 = sbr.rel (%p183) target = $region24
        $region23: #{tpu_custom_call.1} parent=19 // pred_region
          %s186 = sand.u32 %s16, 1
          %s187 = scalar_lea.sflag [#allocation6], %s186
          %s188 = sand.u32 %s73, 1
          %s189 = smul.addr %s188, 64
          %s190 = scalar_lea.vmem [#allocation5], %s189
          %192 = vsyncadd %s187, 0
          %s193 = smul.addr %s24, 16
          %s194 = sadd.s32 %s25, %s193
          %s195 = smul.addr %s194, 4
          %s196 = scalar_lea.hbm %s1, %s195
          %s197 = sshll.u32 %s196, 4
          %s198 = int_to_ptr.hbm [resolvable:$true] %s197
          %s199 = sshll.u32 %s190, 4
          %s200 = int_to_ptr.vmem [resolvable:$true] %s199
          %205 = dma.hbm_to_vmem [thread:$0]  %s198, 1024, %s200, %s187, 64, 64, 4
        $region24: #{tpu_custom_call.1} parent=19 // pred_fallthru
          _
        // Predicated region
        $region25: #{tpu_custom_call.1} parent=19 // pred_check
          %p206 = pneg %p111
        $region26: #{tpu_custom_call.1} parent=19 // pred_check_branch
          %208 = sbr.rel (%p206) target = $region28
        $region27: #{tpu_custom_call.1} parent=19 // pred_region
          %s209 = sand.u32 %s16, 1
          %s210 = scalar_lea.sflag [#allocation6], %s209
          %s211 = sand.u32 %s101, 1
          %s212 = scalar_lea.vmem [#allocation7], %s211
          %214 = vsyncadd %s210, 0
          %s215 = sadd.s32 %s25, %s24
          %s216 = scalar_lea.hbm %s2, %s215
          %s218 = sshll.u32 %s216, 4
          %s219 = int_to_ptr.hbm [resolvable:$true] %s218
          %s220 = sshll.u32 %s212, 4
          %s221 = int_to_ptr.vmem [resolvable:$true] %s220
          %223 = dma.hbm_to_vmem [thread:$0]  %s219, 16, %s221, %s210
        $region28: #{tpu_custom_call.1} parent=19 // pred_fallthru
          _
      $region20: #{tpu_custom_call.1} parent=5 // pred_fallthru
        _
      %p224 = scmp.le.s32.totalorder 1, %s16
      %p225 = scmp.lt.s32.totalorder %s16, 4
      %p226 = pnand %p224, %p225
      %p227 = pneg %p226
      // Predicated region
      $region29: #{tpu_custom_call.1} parent=5 // pred_check
        _
      $region30: #{tpu_custom_call.1} parent=5 // pred_check_branch
        %229 = sbr.rel (%p226) target = $region32
      $region31: #{tpu_custom_call.1} parent=5 // pred_region
        %s230 = ssub.s32 %s16, 1
        // Predicated region
        $region33: #{tpu_custom_call.1} parent=31 // pred_check
          %p231 = pneg %p61
        $region34: #{tpu_custom_call.1} parent=31 // pred_check_branch
          %233 = sbr.rel (%p231) target = $region36
        $region35: #{tpu_custom_call.1} parent=31 // pred_region
          %235 = dma.done [#allocation3], 256
        $region36: #{tpu_custom_call.1} parent=31 // pred_fallthru
          _
        %s236 = sand.u32 %s21, 1
        %s237 = scalar_lea.sflag [#allocation6], %s236
        %s238 = sand.u32 %s76, 1
        %s239 = smul.addr %s238, 64
        %s240 = scalar_lea.vmem [#allocation5], %s239
        // Predicated region
        $region37: #{tpu_custom_call.1} parent=31 // pred_check
          %p241 = pneg %p89
        $region38: #{tpu_custom_call.1} parent=31 // pred_check_branch
          %243 = sbr.rel (%p241) target = $region40
        $region39: #{tpu_custom_call.1} parent=31 // pred_region
          %245 = dma.done %s237, 1024
        $region40: #{tpu_custom_call.1} parent=31 // pred_fallthru
          _
        %s246 = sand.u32 %s21, 1
        %s247 = scalar_lea.sflag [#allocation6], %s246
        %s248 = sand.u32 %s104, 1
        %s249 = scalar_lea.vmem [#allocation7], %s248
        // Predicated region
        $region41: #{tpu_custom_call.1} parent=31 // pred_check
          %p250 = pneg %p117
        $region42: #{tpu_custom_call.1} parent=31 // pred_check_branch
          %252 = sbr.rel (%p250) target = $region44
        $region43: #{tpu_custom_call.1} parent=31 // pred_region
          %254 = dma.done %s247, 16
        $region44: #{tpu_custom_call.1} parent=31 // pred_fallthru
          _
        %p255 = pneg %p61
        %p256 = pneg %p58
        %s257 = sand.u32 %s21, 1
        %s258 = scalar_lea.sflag [#allocation6], %s257
        %s259 = sand.u32 %s76, 1
        %s260 = smul.addr %s259, 64
        %s261 = scalar_lea.vmem [#allocation5], %s260
        %p262 = pneg %p89
        %p263 = pneg %p86
        %s264 = sand.u32 %s21, 1
        %s265 = scalar_lea.sflag [#allocation6], %s264
        %s266 = sand.u32 %s104, 1
        %s267 = scalar_lea.vmem [#allocation7], %s266
        %p268 = pneg %p117
        %p269 = pneg %p114
        %p270 = pneg %p147
        %p271 = pneg %p144
        %s272 = sand.u32 %s134, 1
        %s273 = scalar_lea.sflag [#allocation4], %s272
        %s274 = sand.u32 %s134, 1
        %s275 = smul.addr %s274, 8
        %s276 = scalar_lea.vmem [#allocation8], %s275
        %s277 = smul.u32 2, %s26
        %s278 = smul.u32 2, %s26
        %v279 = vld [vmem:[#allocation2] sm:$0xff]
        %v280 = vld [vmem:[#allocation2 + $0x8] sm:$0xff]
        %v281 = vpack.c.bf16 %v280, %v279
        %v282 = vld [vmem:[%s240] sm:$0xf]
        %v283 = vld [vmem:[%s240 + $0x4] sm:$0xf]
        %v284 = vld [vmem:[%s240 + $0x8] sm:$0xf]
        %v285 = vld [vmem:[%s240 + $0xc] sm:$0xf]
        %v286 = vld [vmem:[%s240 + $0x10] sm:$0xf]
        %v287 = vld [vmem:[%s240 + $0x14] sm:$0xf]
        %v288 = vld [vmem:[%s240 + $0x18] sm:$0xf]
        %v289 = vld [vmem:[%s240 + $0x1c] sm:$0xf]
        %v290 = vld [vmem:[%s240 + $0x20] sm:$0xf]
        %v291 = vld [vmem:[%s240 + $0x24] sm:$0xf]
        %v292 = vld [vmem:[%s240 + $0x28] sm:$0xf]
        %v293 = vld [vmem:[%s240 + $0x2c] sm:$0xf]
        %v294 = vld [vmem:[%s240 + $0x30] sm:$0xf]
        %v295 = vld [vmem:[%s240 + $0x34] sm:$0xf]
        %v296 = vld [vmem:[%s240 + $0x38] sm:$0xf]
        %v297 = vld [vmem:[%s240 + $0x3c] sm:$0xf]
        %v298 = vld [vmem:[%s249] sm:$0x1]
        %v300 = vperm.slane %v298, 0
        %v318 = vunpack.c.l.b16 %v282
        %v319 = vunpack.c.l.b16 %v283
        %v320 = vunpack.c.l.b16 %v284
        %v321 = vunpack.c.l.b16 %v285
        %v322 = vunpack.c.l.b16 %v286
        %v323 = vunpack.c.l.b16 %v287
        %v324 = vunpack.c.l.b16 %v288
        %v325 = vunpack.c.l.b16 %v289
        %v326 = vunpack.c.l.b16 %v290
        %v327 = vunpack.c.l.b16 %v291
        %v328 = vunpack.c.l.b16 %v292
        %v329 = vunpack.c.l.b16 %v293
        %v330 = vunpack.c.l.b16 %v294
        %v331 = vunpack.c.l.b16 %v295
        %v332 = vunpack.c.l.b16 %v296
        %v333 = vunpack.c.l.b16 %v297
        %v334 = vpack.c.b16 %v319, %v318
        %v335 = vpack.c.b16 %v321, %v320
        %v336 = vpack.c.b16 %v323, %v322
        %v337 = vpack.c.b16 %v325, %v324
        %v338 = vpack.c.b16 %v327, %v326
        %v339 = vpack.c.b16 %v329, %v328
        %v340 = vpack.c.b16 %v331, %v330
        %v341 = vpack.c.b16 %v333, %v332
        %350 = vmatpush.bf16.msra.mxu0 %v341
        %351 = vmatpush.bf16.msra.mxu0 %v340
        %352 = vmatpush.bf16.msra.mxu0 %v339
        %353 = vmatpush.bf16.msra.mxu0 %v338
        %354 = vmatpush.bf16.msra.mxu0 %v337
        %355 = vmatpush.bf16.msra.mxu0 %v336
        %356 = vmatpush.bf16.msra.mxu0 %v335
        %357 = vmatpush.bf16.msra.mxu0 %v334
        %358 = vmatmul.bf16.gmra.mxu0 %v281
        %v359 = vpop.f32.mrf.mxu0
        %v360 = vadd.f32 %v300, %v359
        %v361 = vpop.f32.mrf.mxu0
        %v362 = vadd.f32 %v300, %v361
        %363 = vdwg.mxu0
        %v364 = vpack.c.bf16 %v360, %v360
        %v365 = vpack.c.bf16 %v362, %v362
        %366 = vst [vmem:[%s276] sm:$0xf] %v364
        %367 = vst [vmem:[%s276 + $0x4] sm:$0xf] %v365
        %s368 = sand.u32 %s134, 1
        %s369 = scalar_lea.sflag [#allocation4], %s368
        %s370 = sand.u32 %s134, 1
        %s371 = smul.addr %s370, 8
        %s372 = scalar_lea.vmem [#allocation8], %s371
        // Predicated region
        $region45: #{tpu_custom_call.1} parent=31 // pred_check
          %p373 = pneg %p144
        $region46: #{tpu_custom_call.1} parent=31 // pred_check_branch
          %375 = sbr.rel (%p373) target = $region48
        $region47: #{tpu_custom_call.1} parent=31 // pred_region
          %s376 = smul.u32 2, %s26
          %378 = vsyncadd %s369, 0
          %s379 = sadd.s32 %s28, %s376
          %s380 = smul.addr %s27, 2
          %s381 = sadd.s32 %s379, %s380
          %s382 = smul.addr %s381, 4
          %s383 = scalar_lea.hbm %s3, %s382
          %s384 = sshll.u32 %s372, 4
          %s385 = int_to_ptr.vmem [resolvable:$true] %s384
          %s386 = sshll.u32 %s383, 4
          %s387 = int_to_ptr.hbm [resolvable:$true] %s386
          %392 = dma.vmem_to_hbm [thread:$0]  %s385, 128, %s387, %s369, 64, 64, 4
        $region48: #{tpu_custom_call.1} parent=31 // pred_fallthru
          _
      $region32: #{tpu_custom_call.1} parent=5 // pred_fallthru
        _
      %p393 = scmp.le.s32.totalorder 2, %s16
      // Predicated region
      $region49: #{tpu_custom_call.1} parent=5 // pred_check
        %p394 = pneg %p393
      $region50: #{tpu_custom_call.1} parent=5 // pred_check_branch
        %396 = sbr.rel (%p394) target = $region52
      $region51: #{tpu_custom_call.1} parent=5 // pred_region
        %s397 = ssub.s32 %s16, 2
        // Predicated region
        $region53: #{tpu_custom_call.1} parent=51 // pred_check
          %p398 = pneg %p150
        $region54: #{tpu_custom_call.1} parent=51 // pred_check_branch
          %400 = sbr.rel (%p398) target = $region56
        $region55: #{tpu_custom_call.1} parent=51 // pred_region
          %s401 = sand.u32 %s135, 1
          %s402 = scalar_lea.sflag [#allocation4], %s401
          %s403 = sand.u32 %s135, 1
          %s404 = smul.addr %s403, 8
          %s405 = scalar_lea.vmem [#allocation8], %s404
          %407 = dma.done %s402, 128
        $region56: #{tpu_custom_call.1} parent=51 // pred_fallthru
          _
      $region52: #{tpu_custom_call.1} parent=5 // pred_fallthru
        _
    $region6: #{tpu_custom_call.1} parent=1 // loop_footer
      %s20 = sadd.s32 1, %s16
    $region7: #{tpu_custom_call.1} parent=1 // loop_footer_branch
      %15 = sbr.rel target = $region3
    $region8: #{tpu_custom_call.1} parent=1 // loop_exit
      _
    %408 = vsyncpa [#allocation3], 1
    %s409 = scalar_lea.sflag [#allocation3], 1
    %410 = vsyncpa %s409, 1
    %411 = vsyncpa [#allocation6], 1
    %s412 = scalar_lea.sflag [#allocation6], 1
    %413 = vsyncpa %s412, 1
    %414 = vsyncpa [#allocation4], 1
    %s415 = scalar_lea.sflag [#allocation4], 1
    %416 = vsyncpa %s415, 1

</llo_original>
